<compile_context>
chip_gen: v6e
topology: v6e:2x2x1
jax: 0.10.0
libtpu: 0.0.40
codegen_flags: <defaults>
</compile_context>

<pallas_src>
import functools

import jax
import jax.numpy as jnp
from jax import lax
from jax.experimental import pallas as pl
from jax.experimental.pallas import tpu as pltpu

LANES = 128
SUBLANES = 8
MAX_STRIP_ROWS = 512            # in-kernel compute strip (keeps temps ~256 KiB)
TARGET_BLOCK_BYTES = 4 << 20    # per-input block; x2 inputs x2 buffers = 16 MiB
VMEM_LIMIT_BYTES = 48 << 20     # below v7x's 64 MiB physical VMEM, plenty elsewhere


def _rmse_partial_kernel(p_ref, l_ref, out_ref, *, n_rows, tile_rows, strip_rows,
                         inner_steps, n_blocks):
    c = pl.program_id(0)            # core-split axis ("parallel")
    i = pl.program_id(1)            # streaming reduction axis ("arbitrary")
    n_strips = tile_rows // strip_rows

    @pl.when(i == 0)
    def _():
        out_ref[...] = jnp.zeros_like(out_ref)

    blk = c * inner_steps + i       # global row-block index

    def make_fold(masked):
        def strip_body(s, acc):
            r0 = pl.multiple_of(s * strip_rows, strip_rows)
            dp = p_ref[pl.ds(r0, strip_rows), :].astype(jnp.float32)
            dl = l_ref[pl.ds(r0, strip_rows), :].astype(jnp.float32)
            d = dp - dl
            if masked:
                rid = (blk * tile_rows + r0
                       + lax.broadcasted_iota(jnp.int32, (strip_rows, LANES), 0))
                d = jnp.where(rid < n_rows, d, 0.0)
            dsq = d * d
            # Fold the strip's squared diffs into an (8,128) partial: pure VPU
            # adds, no per-step cross-lane (XLU) reduce.
            return acc + jnp.sum(
                dsq.reshape(strip_rows // SUBLANES, SUBLANES, LANES), axis=0)

        def fold(_):
            init = jnp.zeros((SUBLANES, LANES), jnp.float32)
            return lax.fori_loop(0, n_strips, strip_body, init, unroll=True)

        return fold

    if n_rows % tile_rows != 0:
        # Only the very last row-block can be partial; pick the masked fold at
        # runtime so the steady state has zero masking cost.
        partial = lax.cond(blk == n_blocks - 1, make_fold(True), make_fold(False), 0)
    else:
        partial = make_fold(False)(0)

    out_ref[...] += partial[None, :, :]


def rmse_loss(predict, label):
    assert predict.shape == label.shape, "predict/label must have the same shape"
    n = predict.size
    assert n > 0

    p = jnp.ravel(predict)
    l = jnp.ravel(label)

    itemsize = int(jnp.dtype(p.dtype).itemsize)
    # Packed-sublane row count: 8 rows/vreg for 32-bit, 16 for 16-bit, 32 for 8-bit.
    pack = SUBLANES * max(1, 4 // itemsize)
    chunk = pack * LANES

    # ---- ragged tail: tiny plain-JAX pass (avoids a full-array jnp.pad) ----
    tail = n % chunk
    n_main = n - tail
    if tail:
        pt = p[n_main:].astype(jnp.float32)
        lt = l[n_main:].astype(jnp.float32)
        dt = pt - lt
        tail_ssq = jnp.sum(dt * dt)
    else:
        tail_ssq = jnp.zeros((), jnp.float32)

    if n_main == 0:
        return jnp.sqrt(tail_ssq / jnp.float32(n))

    # ---- main streaming reduction in the kernel ----
    if tail:
        # TODO(synk): for ragged sizes this prefix slice still copies the main
        # part once; a manual-DMA (memory_space=pl.ANY) path would avoid it.
        p_main, l_main = p[:n_main], l[:n_main]
    else:
        p_main, l_main = p, l

    rows = n_main // LANES                       # multiple of `pack`
    p2 = p_main.reshape(rows, LANES)
    l2 = l_main.reshape(rows, LANES)

    # Dtype-aware tile sizing (~TARGET_BLOCK_BYTES per input block).
    max_tile_rows = max(
        pack,
        (TARGET_BLOCK_BYTES // (LANES * itemsize) // MAX_STRIP_ROWS) * MAX_STRIP_ROWS,
    )
    tile_rows = min(max_tile_rows, rows)
    if tile_rows > MAX_STRIP_ROWS:
        tile_rows = (tile_rows // MAX_STRIP_ROWS) * MAX_STRIP_ROWS
        strip_rows = MAX_STRIP_ROWS
    else:
        strip_rows = tile_rows

    n_blocks = pl.cdiv(rows, tile_rows)
    # Split the stream across both TensorCores (v7x) when the block count splits
    # evenly; otherwise keep a single split (no out-of-range phantom blocks).
    n_split = 2 if (n_blocks >= 2 and n_blocks % 2 == 0) else 1
    inner_steps = n_blocks // n_split

    kernel = functools.partial(
        _rmse_partial_kernel,
        n_rows=rows, tile_rows=tile_rows, strip_rows=strip_rows,
        inner_steps=inner_steps, n_blocks=n_blocks)

    partials = pl.pallas_call(
        kernel,
        out_shape=jax.ShapeDtypeStruct((n_split, SUBLANES, LANES), jnp.float32),
        grid_spec=pltpu.PrefetchScalarGridSpec(
            num_scalar_prefetch=0,
            grid=(n_split, inner_steps),
            in_specs=[
                pl.BlockSpec((tile_rows, LANES),
                             lambda c, i: (c * inner_steps + i, 0)),
                pl.BlockSpec((tile_rows, LANES),
                             lambda c, i: (c * inner_steps + i, 0)),
            ],
            out_specs=pl.BlockSpec((1, SUBLANES, LANES), lambda c, i: (c, 0, 0)),
        ),
        compiler_params=pltpu.CompilerParams(
            dimension_semantics=("parallel", "arbitrary"),
            vmem_limit_bytes=VMEM_LIMIT_BYTES,
        ),
    )(p2, l2)

    main_ssq = jnp.sum(partials)       # single tiny cross-lane reduce, in XLA
    return jnp.sqrt((main_ssq + tail_ssq) / jnp.float32(n))


if __name__ == "__main__":
    key = jax.random.PRNGKey(0)
    k1, k2 = jax.random.split(key)
    shape = (2, 4, 16, 16)  # small NCHW-like synthetic shape
    predict = jax.random.normal(k1, shape, dtype=jnp.float32)
    label = jax.random.normal(k2, shape, dtype=jnp.float32)

    loss = rmse_loss(predict, label)
    jax.block_until_ready(loss)

    # sanity check against plain-JAX reference
    ref = jnp.sqrt(jnp.mean((predict - label) ** 2))
    assert jnp.allclose(loss, ref, rtol=1e-5, atol=1e-6), (loss, ref)

    print("KERNEL_OK")
</pallas_src>

<mosaic_0001>
module attributes {stable_mosaic.version = 11 : i64} {
  func.func @_rmse_partial_kernel(%arg0: i32, %arg1: i32, %arg2: memref<16x128xf32, #tpu.memory_space<vmem>>, %arg3: memref<16x128xf32, #tpu.memory_space<vmem>>, %arg4: memref<1x8x128xf32, #tpu.memory_space<vmem>>) attributes {dimension_semantics = [#tpu.dimension_semantics<parallel>, #tpu.dimension_semantics<arbitrary>], iteration_bounds = array<i64: 1, 1>, scalar_prefetch = 0 : i64, scratch_operands = 0 : i64, tpu.core_type = #tpu.core_type<tc>, window_params = [{transform_indices = @transform_0, window_bounds = array<i64: 16, 128>}, {transform_indices = @transform_1, window_bounds = array<i64: 16, 128>}, {transform_indices = @transform_2, window_bounds = array<i64: 1, 8, 128>}]} {
    %c0_i32 = arith.constant 0 : i32
    %0 = arith.cmpi eq, %arg1, %c0_i32 : i32
    %1 = arith.extui %0 : i1 to i32
    %c0_i32_0 = arith.constant 0 : i32
    %2 = arith.cmpi ne, %1, %c0_i32_0 : i32
    scf.if %2 {
      %cst_10 = arith.constant 0.000000e+00 : f32
      %19 = vector.broadcast %cst_10 : f32 to vector<1x8x128xf32>
      %c0_11 = arith.constant 0 : index
      %c0_12 = arith.constant 0 : index
      %c0_13 = arith.constant 0 : index
      %20 = vector.load %arg4[%c0_11, %c0_12, %c0_13] : memref<1x8x128xf32, #tpu.memory_space<vmem>>, vector<1x8x128xf32>
      tpu.vector_store %arg4[%c0_11, %c0_12, %c0_13], %19 {strides = array<i32>} : memref<1x8x128xf32, #tpu.memory_space<vmem>>, vector<1x8x128xf32>,
    } else {
    }
    %cst = arith.constant 0.000000e+00 : f32
    %3 = vector.broadcast %cst : f32 to vector<8x128xf32>
    %c0_i32_1 = arith.constant 0 : i32
    %c16_i32 = arith.constant 16 : i32
    %4 = arith.muli %c0_i32_1, %c16_i32 : i32
    %5 = tpu.assume_multiple %4, 16 : i32
    %6 = arith.index_cast %5 : i32 to index
    %c0 = arith.constant 0 : index
    %7 = vector.load %arg2[%6, %c0] : memref<16x128xf32, #tpu.memory_space<vmem>>, vector<16x128xf32>
    %8 = arith.index_cast %5 : i32 to index
    %c0_2 = arith.constant 0 : index
    %9 = vector.load %arg3[%8, %c0_2] : memref<16x128xf32, #tpu.memory_space<vmem>>, vector<16x128xf32>
    %10 = arith.subf %7, %9 : vector<16x128xf32>
    %11 = arith.mulf %10, %10 : vector<16x128xf32>
    %12 = vector.shape_cast %11 : vector<16x128xf32> to vector<2x8x128xf32>
    %cst_3 = arith.constant dense<0.000000e+00> : vector<8x128xf32>
    %13 = vector.multi_reduction <add>, %12, %cst_3 [0] : vector<2x8x128xf32> to vector<8x128xf32>
    %14 = arith.addf %3, %13 : vector<8x128xf32>
    %c1_i32 = arith.constant 1 : i32
    %c0_4 = arith.constant 0 : index
    %c0_5 = arith.constant 0 : index
    %c0_6 = arith.constant 0 : index
    %15 = vector.load %arg4[%c0_4, %c0_5, %c0_6] : memref<1x8x128xf32, #tpu.memory_space<vmem>>, vector<1x8x128xf32>
    %16 = vector.shape_cast %14 : vector<8x128xf32> to vector<1x8x128xf32>
    %17 = arith.addf %15, %16 : vector<1x8x128xf32>
    %c0_7 = arith.constant 0 : index
    %c0_8 = arith.constant 0 : index
    %c0_9 = arith.constant 0 : index
    %18 = vector.load %arg4[%c0_7, %c0_8, %c0_9] : memref<1x8x128xf32, #tpu.memory_space<vmem>>, vector<1x8x128xf32>
    tpu.vector_store %arg4[%c0_7, %c0_8, %c0_9], %17 {strides = array<i32>} : memref<1x8x128xf32, #tpu.memory_space<vmem>>, vector<1x8x128xf32>,
    return
  }
  func.func @transform_0(%arg0: i32, %arg1: i32) -> (i32, i32) {
    %c1_i32 = arith.constant 1 : i32
    %0 = arith.muli %arg0, %c1_i32 : i32
    %1 = arith.addi %0, %arg1 : i32
    %c0_i32 = arith.constant 0 : i32
    %c0_i32_0 = arith.constant 0 : i32
    return %1, %c0_i32 : i32, i32
  }
  func.func @transform_1(%arg0: i32, %arg1: i32) -> (i32, i32) {
    %c1_i32 = arith.constant 1 : i32
    %0 = arith.muli %arg0, %c1_i32 : i32
    %1 = arith.addi %0, %arg1 : i32
    %c0_i32 = arith.constant 0 : i32
    %c0_i32_0 = arith.constant 0 : i32
    return %1, %c0_i32 : i32, i32
  }
  func.func @transform_2(%arg0: i32, %arg1: i32) -> (i32, i32, i32) {
    %c0_i32 = arith.constant 0 : i32
    %c0_i32_0 = arith.constant 0 : i32
    %c0_i32_1 = arith.constant 0 : i32
    return %arg0, %c0_i32, %c0_i32_0 : i32, i32, i32
  }
}

</mosaic_0001>

<llo_original>
// kernel: tpu_custom_call.1
$region0: #{tpu_custom_call.1}
  #allocation0 [shape = 'u32[]', space=smem, size = 0x4, offset = 0x4, fixed_abs, tag = 'smem constant byte address 0x4 - core index']
  #allocation1 [shape = 'u32[144,128]{1,0:T(1,128)}', space=vmem, size = 0x12000, scoped, tag = 'internal scratch']
  %s0 = inlined_call_operand.hbm [shape: f32[16,128], index: 0, kind: input, shape index: {}]
  %s1 = inlined_call_operand.hbm [shape: f32[16,128], index: 1, kind: input, shape index: {}]
  %s2 = inlined_call_operand.hbm [shape: f32[1,8,128], index: 2, kind: output, shape index: {}]
  %s3 = sld [smem:[#allocation0]]
  $region30: #{tpu_custom_call.1} parent=0
    _
  %s5 = ssub.s32 1, %s3
  %s6 = scalar_select 0, %s5, %s3
  $region1: #{tpu_custom_call.1} parent=0
    #allocation2 [shape = 'u8[8192]{0}', space=vmem, size = 0x2000, scoped, tag = 'input window, operand 0, single buffered']
    #allocation3 [shape = 's32[1]{0}', space=sflag, size = 0x4, scoped, tag = 'scoped memory for tpu_custom_call.1']
    #allocation4 [shape = 's32[1]{0}', space=sflag, size = 0x4, scoped, tag = 'scoped memory for tpu_custom_call.1']
    #allocation5 [shape = 'u8[8192]{0}', space=vmem, size = 0x2000, scoped, tag = 'input window, operand 1, single buffered']
    #allocation6 [shape = 's32[1]{0}', space=sflag, size = 0x4, scoped, tag = 'scoped memory for tpu_custom_call.1']
    #allocation7 [shape = 'u8[4096]{0}', space=vmem, size = 0x1000, scoped, tag = 'output window, operand 0, single buffered']
    %7 = vsyncpa [#allocation3], 0
    %8 = vsyncpa [#allocation6], 0
    %9 = vsyncpa [#allocation4], 0
    // Predicated region
    $region2: #{tpu_custom_call.1} parent=1 // pred_check
      _
    $region3: #{tpu_custom_call.1} parent=1 // pred_check_branch
      %11 = sbr.rel (0) target = $region5
    $region4: #{tpu_custom_call.1} parent=1 // pred_region
      %s12 = sadd.s32 0, 0
      %s13 = smul.u32 2, %s12
      %s15 = ssub.s32 256, 256
      %16 = vsyncadd [#allocation3], %s15
      %s17 = smul.addr %s13, 128
      %s18 = scalar_lea.hbm %s0, %s17
      %s19 = sshll.u32 [#allocation2], 4
      %s20 = int_to_ptr.vmem [resolvable:$true] %s19
      %25 = dma.hbm_to_vmem [thread:$0]  %s18, 256, %s20, [#allocation3], 128, 128, 8
    $region5: #{tpu_custom_call.1} parent=1 // pred_fallthru
      _
    // Predicated region
    $region6: #{tpu_custom_call.1} parent=1 // pred_check
      _
    $region7: #{tpu_custom_call.1} parent=1 // pred_check_branch
      %27 = sbr.rel (0) target = $region9
    $region8: #{tpu_custom_call.1} parent=1 // pred_region
      %s28 = sadd.s32 0, 0
      %s29 = smul.u32 2, %s28
      %s31 = ssub.s32 256, 256
      %32 = vsyncadd [#allocation6], %s31
      %s33 = smul.addr %s29, 128
      %s34 = scalar_lea.hbm %s1, %s33
      %s35 = sshll.u32 [#allocation5], 4
      %s36 = int_to_ptr.vmem [resolvable:$true] %s35
      %41 = dma.hbm_to_vmem [thread:$0]  %s34, 256, %s36, [#allocation6], 128, 128, 8
    $region9: #{tpu_custom_call.1} parent=1 // pred_fallthru
      _
    // Predicated region
    $region10: #{tpu_custom_call.1} parent=1 // pred_check
      _
    $region11: #{tpu_custom_call.1} parent=1 // pred_check_branch
      %43 = sbr.rel (0) target = $region13
    $region12: #{tpu_custom_call.1} parent=1 // pred_region
      %44 = dma.done [#allocation3], 256
    $region13: #{tpu_custom_call.1} parent=1 // pred_fallthru
      _
    // Predicated region
    $region14: #{tpu_custom_call.1} parent=1 // pred_check
      _
    $region15: #{tpu_custom_call.1} parent=1 // pred_check_branch
      %46 = sbr.rel (0) target = $region17
    $region16: #{tpu_custom_call.1} parent=1 // pred_region
      %47 = dma.done [#allocation6], 256
    $region17: #{tpu_custom_call.1} parent=1 // pred_fallthru
      _
    %s48 = sadd.s32 0, 0
    %s49 = smul.u32 2, %s48
    %s50 = sadd.s32 0, 0
    %s51 = smul.u32 2, %s50
    %p52 = scmp.eq.s32.totalorder 0, 0
    // Predicated region
    $region18: #{tpu_custom_call.1} parent=1 // pred_check
      %p53 = pneg %p52
    $region19: #{tpu_custom_call.1} parent=1 // pred_check_branch
      %55 = sbr.rel (%p53) target = $region21
    $region20: #{tpu_custom_call.1} parent=1 // pred_region
      %56 = vst [vmem:[#allocation7] sm:$0xff] 0.0
    $region21: #{tpu_custom_call.1} parent=1 // pred_fallthru
      _
    %v57 = vld [vmem:[#allocation2] sm:$0xff]
    %v58 = vld [vmem:[#allocation2 + $0x8] sm:$0xff]
    %v59 = vld [vmem:[#allocation5] sm:$0xff]
    %v60 = vld [vmem:[#allocation5 + $0x8] sm:$0xff]
    %v61 = vsub.f32 %v57, %v59
    %v62 = vsub.f32 %v58, %v60
    %v63 = vmul.f32 %v61, %v61
    %v64 = vmul.f32 %v62, %v62
    %v65 = vadd.f32 %v63, %v64
    %v66 = vadd.f32 %v65, 0.0
    %v67 = vld [vmem:[#allocation7] sm:$0xff]
    %v68 = vadd.f32 %v67, %v66
    %69 = vst [vmem:[#allocation7] sm:$0xff] %v68
    // Predicated region
    $region22: #{tpu_custom_call.1} parent=1 // pred_check
      _
    $region23: #{tpu_custom_call.1} parent=1 // pred_check_branch
      %71 = sbr.rel (0) target = $region25
    $region24: #{tpu_custom_call.1} parent=1 // pred_region
      %s73 = ssub.s32 128, 128
      %74 = vsyncadd [#allocation4], %s73
      %s76 = sshll.u32 [#allocation7], 4
      %s77 = int_to_ptr.vmem [resolvable:$true] %s76
      %79 = dma.vmem_to_hbm [thread:$0]  %s77, 128, %s2, [#allocation4]
    $region25: #{tpu_custom_call.1} parent=1 // pred_fallthru
      _
    // Predicated region
    $region26: #{tpu_custom_call.1} parent=1 // pred_check
      _
    $region27: #{tpu_custom_call.1} parent=1 // pred_check_branch
      %81 = sbr.rel (0) target = $region29
    $region28: #{tpu_custom_call.1} parent=1 // pred_region
      %82 = dma.done [#allocation4], 128
    $region29: #{tpu_custom_call.1} parent=1 // pred_fallthru
      _
    %83 = vsyncpa [#allocation3], 1
    %84 = vsyncpa [#allocation6], 1
    %85 = vsyncpa [#allocation4], 1

</llo_original>
